<compile_context>
chip_gen: v7x
topology: tpu7x:2x2x1
jax: 0.10.0
libtpu: 0.0.40
codegen_flags: <defaults>
</compile_context>

<pallas_src>
import math

import jax
import jax.numpy as jnp
from jax.experimental import pallas as pl
from jax.experimental.pallas import tpu as pltpu


def _copy_kernel(x_ref, o_ref):
    # Identity copy of the current (tile_rows, lane_w) VMEM tile.
    o_ref[...] = x_ref[...]


def _resolve_shape(batch, total, shape):
    """Resolve a possible single -1 in `shape`, like torch.view does."""
    shape = list(shape)
    per_batch = total // batch
    if -1 in shape:
        idx = shape.index(-1)
        known = math.prod([s for s in shape if s != -1])
        shape[idx] = per_batch // known
    assert math.prod(shape) == per_batch, "View shape incompatible with input"
    return tuple(shape)


# Per-buffer VMEM budget for one block of the copy.  Double-buffered input +
# output = 4 buffers => ~8 MiB peak, under every generation's scoped default.
_BLOCK_BYTES_BUDGET = 2 * 1024 * 1024


def _choose_slab(total, itemsize):
    """Pick a lane-dense (rows, lane_w) layout and a multiple-of-8 row tile.

    Returns (rows, lane_w, tile_rows), or None if no multiple-of-128 lane
    width divides `total` (caller falls back to a single full-array block).
    """
    lane_w = 0
    for cand in (1024, 512, 256, 128):
        if total % cand == 0:
            lane_w = cand
            break
    if lane_w == 0:
        return None
    rows = total // lane_w

    # Largest multiple-of-8 row tile that fits the per-buffer budget.
    max_rows = max(8, _BLOCK_BYTES_BUDGET // (lane_w * itemsize))
    tile_rows = (max_rows // 8) * 8
    if tile_rows >= rows:
        # Whole slab fits in one block; full-extent block is always legal.
        tile_rows = rows
    return rows, lane_w, tile_rows


def view_forward(x, *target_shape):
    """Pallas equivalent of View(*target_shape)(x)."""
    batch = x.shape[0]
    total = x.size
    out_tail = _resolve_shape(batch, total, target_shape)
    out_shape = (batch,) + out_tail
    itemsize = jnp.dtype(x.dtype).itemsize

    cost = pl.CostEstimate(
        flops=0, transcendentals=0, bytes_accessed=2 * total * itemsize
    )

    slab = _choose_slab(total, itemsize)
    if slab is None:
        # TODO(synk): only reached when total elements is not a multiple of
        # 128; single full-array block is fine for small tensors but a large
        # tensor should be padded to a 128-multiple lane width instead.
        n = total // batch
        x2d = jnp.reshape(x, (batch, n))
        y2d = pl.pallas_call(
            _copy_kernel,
            out_shape=jax.ShapeDtypeStruct((batch, n), x.dtype),
            grid=(1,),
            in_specs=[pl.BlockSpec((batch, n), lambda i: (0, 0))],
            out_specs=pl.BlockSpec((batch, n), lambda i: (0, 0)),
            cost_estimate=cost,
        )(x2d)
        return jnp.reshape(y2d, out_shape)

    rows, lane_w, tile_rows = slab
    # Metadata-only flatten to the lane-dense slab (row-major, like torch).
    x2d = jnp.reshape(x, (rows, lane_w))
    grid = (pl.cdiv(rows, tile_rows),)

    y2d = pl.pallas_call(
        _copy_kernel,
        out_shape=jax.ShapeDtypeStruct((rows, lane_w), x.dtype),
        grid=grid,
        in_specs=[pl.BlockSpec((tile_rows, lane_w), lambda i: (i, 0))],
        out_specs=pl.BlockSpec((tile_rows, lane_w), lambda i: (i, 0)),
        compiler_params=pltpu.CompilerParams(
            dimension_semantics=("parallel",)
        ),
        cost_estimate=cost,
    )(x2d)

    # Final reshape to (B, *target_shape) — pure metadata / glue.
    return jnp.reshape(y2d, out_shape)


if __name__ == "__main__":
    key = jax.random.PRNGKey(0)
    # NCHW input consistent with PyTorch conv conventions.
    B, C, H, W = 2, 4, 16, 16
    x = jax.random.normal(key, (B, C, H, W), dtype=jnp.float32)

    # View(4, 256): x.view(B, 4, 256)
    out = jax.block_until_ready(view_forward(x, 4, 256))
    ref = jnp.reshape(x, (B, 4, 256))
    assert out.shape == (B, 4, 256)
    assert out.dtype == x.dtype
    assert bool(jnp.array_equal(out, ref))

    # Also exercise a -1 target, like View(-1) flattening.
    out_flat = jax.block_until_ready(view_forward(x, -1))
    assert out_flat.shape == (B, C * H * W)
    assert bool(jnp.array_equal(out_flat, jnp.reshape(x, (B, -1))))

    # Larger shape to exercise the multi-step, row-tiled path.
    x_big = jax.random.normal(key, (4, 32, 32, 32), dtype=jnp.float32)
    out_big = jax.block_until_ready(view_forward(x_big, 32, -1))
    assert out_big.shape == (4, 32, 32 * 32)
    assert bool(jnp.array_equal(out_big, jnp.reshape(x_big, (4, 32, -1))))

    print("KERNEL_OK")
</pallas_src>

<mosaic_0001>
module attributes {stable_mosaic.version = 11 : i64} {
  func.func @_copy_kernel(%arg0: i32, %arg1: memref<2x1024xf32, #tpu.memory_space<vmem>>, %arg2: memref<2x1024xf32, #tpu.memory_space<vmem>>) attributes {dimension_semantics = [#tpu.dimension_semantics<parallel>], iteration_bounds = array<i64: 1>, scalar_prefetch = 0 : i64, scratch_operands = 0 : i64, tpu.core_type = #tpu.core_type<tc>, window_params = [{transform_indices = @transform_0, window_bounds = array<i64: 2, 1024>}, {transform_indices = @transform_1, window_bounds = array<i64: 2, 1024>}]} {
    %c0 = arith.constant 0 : index
    %c0_0 = arith.constant 0 : index
    %0 = vector.load %arg1[%c0, %c0_0] : memref<2x1024xf32, #tpu.memory_space<vmem>>, vector<2x1024xf32>
    %c0_1 = arith.constant 0 : index
    %c0_2 = arith.constant 0 : index
    %1 = vector.load %arg2[%c0_1, %c0_2] : memref<2x1024xf32, #tpu.memory_space<vmem>>, vector<2x1024xf32>
    tpu.vector_store %arg2[%c0_1, %c0_2], %0 {strides = array<i32>} : memref<2x1024xf32, #tpu.memory_space<vmem>>, vector<2x1024xf32>,
    return
  }
  func.func @transform_0(%arg0: i32) -> (i32, i32) {
    %c0_i32 = arith.constant 0 : i32
    %c0_i32_0 = arith.constant 0 : i32
    return %arg0, %c0_i32 : i32, i32
  }
  func.func @transform_1(%arg0: i32) -> (i32, i32) {
    %c0_i32 = arith.constant 0 : i32
    %c0_i32_0 = arith.constant 0 : i32
    return %arg0, %c0_i32 : i32, i32
  }
}

</mosaic_0001>

<llo_original>
// kernel: tpu_custom_call.1
$region0: #{tpu_custom_call.1}
  #allocation0 [shape = 'u32[]', space=smem, size = 0x4, offset = 0x4, fixed_abs, tag = 'smem constant byte address 0x4 - core index']
  #allocation1 [shape = 'u32[144,128]{1,0:T(1,128)}', space=vmem, size = 0x12000, scoped, tag = 'internal scratch']
  %s0 = inlined_call_operand.hbm [shape: f32[2,1024], index: 0, kind: input, shape index: {}]
  %s1 = inlined_call_operand.hbm [shape: f32[2,1024], index: 1, kind: output, shape index: {}]
  %s2 = sld [smem:[#allocation0]]
  $region18: #{tpu_custom_call.1} parent=0
    _
  %s4 = ssub.s32 1, %s2
  %s5 = scalar_select 0, %s4, %s2
  $region1: #{tpu_custom_call.1} parent=0
    #allocation2 [shape = 'u8[8192]{0}', space=vmem, size = 0x2000, scoped, tag = 'input window, operand 0, single buffered']
    #allocation3 [shape = 's32[1]{0}', space=sflag, size = 0x4, scoped, tag = 'scoped memory for tpu_custom_call.1']
    #allocation4 [shape = 's32[1]{0}', space=sflag, size = 0x4, scoped, tag = 'scoped memory for tpu_custom_call.1']
    #allocation5 [shape = 'u8[8192]{0}', space=vmem, size = 0x2000, scoped, tag = 'output window, operand 0, single buffered']
    %6 = vsyncpa [#allocation3], 0
    %7 = vsyncpa [#allocation4], 0
    // Predicated region
    $region2: #{tpu_custom_call.1} parent=1 // pred_check
      _
    $region3: #{tpu_custom_call.1} parent=1 // pred_check_branch
      %9 = sbr.rel (0) target = $region5
    $region4: #{tpu_custom_call.1} parent=1 // pred_region
      %s11 = ssub.s32 256, 256
      %12 = vsyncadd [#allocation3], %s11
      %s14 = sshll.u32 [#allocation2], 4
      %s15 = int_to_ptr.vmem [resolvable:$true] %s14
      %17 = dma.hbm_to_vmem [thread:$0]  %s0, 256, %s15, [#allocation3]
    $region5: #{tpu_custom_call.1} parent=1 // pred_fallthru
      _
    // Predicated region
    $region6: #{tpu_custom_call.1} parent=1 // pred_check
      _
    $region7: #{tpu_custom_call.1} parent=1 // pred_check_branch
      %19 = sbr.rel (0) target = $region9
    $region8: #{tpu_custom_call.1} parent=1 // pred_region
      %20 = dma.done [#allocation3], 256
    $region9: #{tpu_custom_call.1} parent=1 // pred_fallthru
      _
    %v21 = vld [vmem:[#allocation2] sm:$0xff]
    %v22 = vld [vmem:[#allocation2 + $0x8] sm:$0xff]
    %23 = vst [vmem:[#allocation5] sm:$0xff] %v21
    %24 = vst [vmem:[#allocation5 + $0x8] sm:$0xff] %v22
    // Predicated region
    $region10: #{tpu_custom_call.1} parent=1 // pred_check
      _
    $region11: #{tpu_custom_call.1} parent=1 // pred_check_branch
      %26 = sbr.rel (0) target = $region13
    $region12: #{tpu_custom_call.1} parent=1 // pred_region
      %s28 = ssub.s32 256, 256
      %29 = vsyncadd [#allocation4], %s28
      %s31 = sshll.u32 [#allocation5], 4
      %s32 = int_to_ptr.vmem [resolvable:$true] %s31
      %34 = dma.vmem_to_hbm [thread:$0]  %s32, 256, %s1, [#allocation4]
    $region13: #{tpu_custom_call.1} parent=1 // pred_fallthru
      _
    // Predicated region
    $region14: #{tpu_custom_call.1} parent=1 // pred_check
      _
    $region15: #{tpu_custom_call.1} parent=1 // pred_check_branch
      %36 = sbr.rel (0) target = $region17
    $region16: #{tpu_custom_call.1} parent=1 // pred_region
      %37 = dma.done [#allocation4], 256
    $region17: #{tpu_custom_call.1} parent=1 // pred_fallthru
      _
    %38 = vsyncpa [#allocation3], 1
    %39 = vsyncpa [#allocation4], 1

</llo_original>
